<compile_context>
chip_gen: v5e
topology: v5e:2x2
jax: 0.10.0
libtpu: 0.0.40
codegen_flags: <defaults>
</compile_context>

<pallas_src>
import functools

import jax
import jax.numpy as jnp
from jax.experimental import pallas as pl
from jax.experimental.pallas import tpu as pltpu


def _instance_norm_kernel(x_ref, gamma_ref, beta_ref, o_ref, *, eps):
    # x_ref : (1, C, HW) block = one sample, channels on sublanes, spatial on lanes
    # gamma_ref, beta_ref : (C, 1) affine params (resident across the grid)
    x = x_ref[0]                                   # (C, HW) float32
    hw = x.shape[-1]
    inv_hw = 1.0 / hw                              # static Python float

    mean = jnp.sum(x, axis=-1, keepdims=True) * inv_hw          # (C, 1)
    centered = x - mean                                          # (C, HW)
    var = jnp.sum(centered * centered, axis=-1, keepdims=True) * inv_hw
    inv_std = jax.lax.rsqrt(var + eps)                            # (C, 1), EUP

    # y = (x - mean) * (inv_std * gamma) + beta   (biased variance, eps inside sqrt)
    o_ref[0] = centered * (inv_std * gamma_ref[...]) + beta_ref[...]


def instance_norm2d(x, weight, bias, *, eps=1e-5):
    """nn.InstanceNorm2d(C, affine=True) forward.

    x      : (N, C, H, W) float32
    weight : (C,) affine scale (gamma)
    bias   : (C,) affine shift (beta)
    returns (N, C, H, W) float32
    """
    N, C, H, W = x.shape
    HW = H * W

    # NCHW -> (N, C, HW): contiguous reshape, no transpose / extra HBM pass.
    xr = x.reshape(N, C, HW).astype(jnp.float32)
    gamma = weight.reshape(C, 1).astype(jnp.float32)
    beta = bias.reshape(C, 1).astype(jnp.float32)

    out = pl.pallas_call(
        functools.partial(_instance_norm_kernel, eps=eps),
        out_shape=jax.ShapeDtypeStruct((N, C, HW), jnp.float32),
        grid=(N,),
        in_specs=[
            pl.BlockSpec((1, C, HW), lambda n: (n, 0, 0)),   # activations, streamed
            pl.BlockSpec((C, 1), lambda n: (0, 0)),          # gamma, resident
            pl.BlockSpec((C, 1), lambda n: (0, 0)),          # beta, resident
        ],
        out_specs=pl.BlockSpec((1, C, HW), lambda n: (n, 0, 0)),
        compiler_params=pltpu.CompilerParams(
            dimension_semantics=("parallel",)),
    )(xr, gamma, beta)

    return out.reshape(N, C, H, W)


def _reference(x, weight, bias, eps=1e-5):
    # Pure-JAX reference of torch.nn.InstanceNorm2d(affine=True) forward.
    mean = jnp.mean(x, axis=(2, 3), keepdims=True)
    var = jnp.mean((x - mean) ** 2, axis=(2, 3), keepdims=True)  # biased variance
    xhat = (x - mean) / jnp.sqrt(var + eps)
    return xhat * weight[None, :, None, None] + bias[None, :, None, None]


if __name__ == "__main__":
    key = jax.random.PRNGKey(0)
    kx, kw, kb = jax.random.split(key, 3)

    # Small shapes consistent with the module: num_features = 3 (fixed by
    # nn.InstanceNorm2d(3, affine=True)), so C = 3.
    N, C, H, W = 2, 3, 16, 16
    x = jax.random.normal(kx, (N, C, H, W), dtype=jnp.float32)

    # PyTorch default init is weight=1, bias=0; use random values to also
    # exercise the affine path (deterministic via PRNGKey(0)).
    weight = 1.0 + 0.1 * jax.random.normal(kw, (C,), dtype=jnp.float32)
    bias = 0.1 * jax.random.normal(kb, (C,), dtype=jnp.float32)

    out = instance_norm2d(x, weight, bias)
    jax.block_until_ready(out)

    ref = _reference(x, weight, bias)
    assert out.shape == (N, C, H, W), out.shape
    assert jnp.allclose(out, ref, atol=1e-4, rtol=1e-4), \
        float(jnp.max(jnp.abs(out - ref)))

    print("KERNEL_OK")
</pallas_src>

<mosaic_0001>
module attributes {stable_mosaic.version = 11 : i64} {
  func.func @_instance_norm_kernel(%arg0: i32, %arg1: memref<1x3x256xf32, #tpu.memory_space<vmem>>, %arg2: memref<3x1xf32, #tpu.memory_space<vmem>>, %arg3: memref<3x1xf32, #tpu.memory_space<vmem>>, %arg4: memref<1x3x256xf32, #tpu.memory_space<vmem>>) attributes {dimension_semantics = [#tpu.dimension_semantics<parallel>], iteration_bounds = array<i64: 2>, scalar_prefetch = 0 : i64, scratch_operands = 0 : i64, tpu.core_type = #tpu.core_type<tc>, window_params = [{transform_indices = @transform_0, window_bounds = array<i64: 1, 3, 256>}, {pipeline_mode = #tpu.pipeline_mode<synchronous>, transform_indices = @transform_1, window_bounds = array<i64: 3, 1>}, {pipeline_mode = #tpu.pipeline_mode<synchronous>, transform_indices = @transform_2, window_bounds = array<i64: 3, 1>}, {transform_indices = @transform_3, window_bounds = array<i64: 1, 3, 256>}]} {
    %c0 = arith.constant 0 : index
    %c0_0 = arith.constant 0 : index
    %c0_1 = arith.constant 0 : index
    %0 = vector.load %arg1[%c0, %c0_0, %c0_1] : memref<1x3x256xf32, #tpu.memory_space<vmem>>, vector<1x3x256xf32>
    %1 = vector.shape_cast %0 : vector<1x3x256xf32> to vector<3x256xf32>
    %cst = arith.constant dense<0.000000e+00> : vector<3xf32>
    %2 = vector.multi_reduction <add>, %1, %cst [1] : vector<3x256xf32> to vector<3xf32>
    %3 = vector.shape_cast %2 : vector<3xf32> to vector<3x1xf32>
    %cst_2 = arith.constant 3.906250e-03 : f32
    %4 = vector.broadcast %cst_2 : f32 to vector<3x1xf32>
    %5 = arith.mulf %3, %4 : vector<3x1xf32>
    %6 = vector.broadcast %5 : vector<3x1xf32> to vector<3x256xf32>
    %7 = arith.subf %1, %6 : vector<3x256xf32>
    %8 = arith.mulf %7, %7 : vector<3x256xf32>
    %cst_3 = arith.constant dense<0.000000e+00> : vector<3xf32>
    %9 = vector.multi_reduction <add>, %8, %cst_3 [1] : vector<3x256xf32> to vector<3xf32>
    %10 = vector.shape_cast %9 : vector<3xf32> to vector<3x1xf32>
    %cst_4 = arith.constant 3.906250e-03 : f32
    %11 = vector.broadcast %cst_4 : f32 to vector<3x1xf32>
    %12 = arith.mulf %10, %11 : vector<3x1xf32>
    %cst_5 = arith.constant 9.99999974E-6 : f32
    %13 = vector.broadcast %cst_5 : f32 to vector<3x1xf32>
    %14 = arith.addf %12, %13 : vector<3x1xf32>
    %15 = math.rsqrt %14 : vector<3x1xf32>
    %c0_6 = arith.constant 0 : index
    %c0_7 = arith.constant 0 : index
    %16 = vector.load %arg2[%c0_6, %c0_7] : memref<3x1xf32, #tpu.memory_space<vmem>>, vector<3x1xf32>
    %17 = arith.mulf %15, %16 : vector<3x1xf32>
    %18 = vector.broadcast %17 : vector<3x1xf32> to vector<3x256xf32>
    %19 = arith.mulf %7, %18 : vector<3x256xf32>
    %c0_8 = arith.constant 0 : index
    %c0_9 = arith.constant 0 : index
    %20 = vector.load %arg3[%c0_8, %c0_9] : memref<3x1xf32, #tpu.memory_space<vmem>>, vector<3x1xf32>
    %21 = vector.broadcast %20 : vector<3x1xf32> to vector<3x256xf32>
    %22 = arith.addf %19, %21 : vector<3x256xf32>
    %c0_10 = arith.constant 0 : index
    %c0_11 = arith.constant 0 : index
    %c0_12 = arith.constant 0 : index
    %23 = vector.load %arg4[%c0_10, %c0_11, %c0_12] : memref<1x3x256xf32, #tpu.memory_space<vmem>>, vector<1x3x256xf32>
    %24 = vector.shape_cast %23 : vector<1x3x256xf32> to vector<3x256xf32>
    %25 = vector.shape_cast %22 : vector<3x256xf32> to vector<1x3x256xf32>
    tpu.vector_store %arg4[%c0_10, %c0_11, %c0_12], %25 {strides = array<i32>} : memref<1x3x256xf32, #tpu.memory_space<vmem>>, vector<1x3x256xf32>,
    return
  }
  func.func @transform_0(%arg0: i32) -> (i32, i32, i32) {
    %c0_i32 = arith.constant 0 : i32
    %c0_i32_0 = arith.constant 0 : i32
    %c0_i32_1 = arith.constant 0 : i32
    return %arg0, %c0_i32, %c0_i32_0 : i32, i32, i32
  }
  func.func @transform_1(%arg0: i32) -> (i32, i32) {
    %c0_i32 = arith.constant 0 : i32
    %c0_i32_0 = arith.constant 0 : i32
    %c0_i32_1 = arith.constant 0 : i32
    return %c0_i32, %c0_i32_0 : i32, i32
  }
  func.func @transform_2(%arg0: i32) -> (i32, i32) {
    %c0_i32 = arith.constant 0 : i32
    %c0_i32_0 = arith.constant 0 : i32
    %c0_i32_1 = arith.constant 0 : i32
    return %c0_i32, %c0_i32_0 : i32, i32
  }
  func.func @transform_3(%arg0: i32) -> (i32, i32, i32) {
    %c0_i32 = arith.constant 0 : i32
    %c0_i32_0 = arith.constant 0 : i32
    %c0_i32_1 = arith.constant 0 : i32
    return %arg0, %c0_i32, %c0_i32_0 : i32, i32, i32
  }
}

</mosaic_0001>

<llo_original>
// kernel: tpu_custom_call.1
$region0: #{tpu_custom_call.1}
  #allocation0 [shape = 'u32[]', space=smem, size = 0x4, offset = 0x4, fixed_abs, tag = 'smem constant byte address 0x4 - core index']
  #allocation1 [shape = 'u32[72,128]{1,0:T(1,128)}', space=vmem, size = 0x9000, scoped, tag = 'internal scratch']
  %s0 = inlined_call_operand.vmem [shape: f32[2,3,256], index: 0, kind: input, shape index: {}]
  %s1 = inlined_call_operand.vmem [shape: f32[3,1], index: 1, kind: input, shape index: {}]
  %s2 = inlined_call_operand.vmem [shape: f32[3,1], index: 2, kind: input, shape index: {}]
  %s3 = inlined_call_operand.vmem [shape: f32[2,3,256], index: 3, kind: output, shape index: {}]
  %s4 = sld [smem:[#allocation0]]
  $region45: #{tpu_custom_call.1} parent=0
    _
  %s6 = ssub.s32 1, %s4
  %s7 = scalar_select 0, %s6, %s4
  loop: start=0, step=1, limit=4
  $region2: #{tpu_custom_call.1} parent=0 // loop_pre_header
    _
  $region3: #{tpu_custom_call.1} parent=0 // loop_header
    %s9 = sphi 0, %s13
    %p10 = scmp.ge.s32.totalorder %s9, 4
    %s19 = sphi 0, %s21
    %s22 = sphi 0, %s19
    %s23 = sphi 0, %s22
    %s39 = sphi 0, %s23
    %s43 = sphi 0, %s43
    %s45 = sphi 0, %s43
    %s46 = sphi 0, %s45
    %s60 = sphi 0, %s46
    %s64 = sphi 0, %s64
    %s66 = sphi 0, %s64
    %s67 = sphi 0, %s66
    %s81 = sphi 0, %s67
    %s87 = sphi 0, %s89
    %s90 = sphi 0, %s87
    %s91 = sphi 0, %s90
    %s107 = sphi 0, %s91
  $region4: #{tpu_custom_call.1} parent=0 // loop_header_branch
    %12 = sbr.rel (%p10) target = $region8
  $region5: #{tpu_custom_call.1} parent=0 // loop_body
    %s14 = ssub.s32 %s9, 1
    %s15 = ssub.s32 %s9, 2
    %s16 = sadd.s32 %s9, 1
    %s17 = ssub.s32 %s9, %s16
    %p18 = scmp.eq.s32.totalorder %s17, 0
    %s20 = sadd.s32 %s19, 1
    %s21 = scalar_select %p18, %s19, %s20
    %p24 = pneg %p18
    %p25 = scmp.eq.s32.totalorder %s9, 1
    %p26 = por %p24, %p25
    %p27 = scmp.ne.s32.totalorder %s19, %s22
    %p28 = scmp.eq.s32.totalorder %s9, 0
    %p29 = por %p27, %p28
    %p30 = scmp.ne.s32.totalorder %s19, %s22
    %p31 = scmp.eq.s32.totalorder %s14, 1
    %p32 = por %p30, %p31
    %p33 = scmp.ne.s32.totalorder %s22, %s23
    %p34 = scmp.eq.s32.totalorder %s14, 0
    %p35 = por %p33, %p34
    %p36 = scmp.ne.s32.totalorder %s22, %s23
    %p37 = scmp.eq.s32.totalorder %s15, 1
    %p38 = por %p36, %p37
    %p40 = scmp.ne.s32.totalorder %s23, %s39
    %p41 = scmp.eq.s32.totalorder %s15, 0
    %p42 = por %p40, %p41
    %s44 = sadd.s32 %s43, 1
    %p47 = scmp.eq.s32.totalorder %s9, 1
    %p48 = scmp.ne.s32.totalorder %s43, %s45
    %p49 = scmp.eq.s32.totalorder %s9, 0
    %p50 = por %p48, %p49
    %p51 = scmp.ne.s32.totalorder %s43, %s45
    %p52 = scmp.eq.s32.totalorder %s14, 1
    %p53 = por %p51, %p52
    %p54 = scmp.ne.s32.totalorder %s45, %s46
    %p55 = scmp.eq.s32.totalorder %s14, 0
    %p56 = por %p54, %p55
    %p57 = scmp.ne.s32.totalorder %s45, %s46
    %p58 = scmp.eq.s32.totalorder %s15, 1
    %p59 = por %p57, %p58
    %p61 = scmp.ne.s32.totalorder %s46, %s60
    %p62 = scmp.eq.s32.totalorder %s15, 0
    %p63 = por %p61, %p62
    %s65 = sadd.s32 %s64, 1
    %p68 = scmp.eq.s32.totalorder %s9, 1
    %p69 = scmp.ne.s32.totalorder %s64, %s66
    %p70 = scmp.eq.s32.totalorder %s9, 0
    %p71 = por %p69, %p70
    %p72 = scmp.ne.s32.totalorder %s64, %s66
    %p73 = scmp.eq.s32.totalorder %s14, 1
    %p74 = por %p72, %p73
    %p75 = scmp.ne.s32.totalorder %s66, %s67
    %p76 = scmp.eq.s32.totalorder %s14, 0
    %p77 = por %p75, %p76
    %p78 = scmp.ne.s32.totalorder %s66, %s67
    %p79 = scmp.eq.s32.totalorder %s15, 1
    %p80 = por %p78, %p79
    %p82 = scmp.ne.s32.totalorder %s67, %s81
    %p83 = scmp.eq.s32.totalorder %s15, 0
    %p84 = por %p82, %p83
    %s85 = ssub.s32 %s9, %s16
    %p86 = scmp.eq.s32.totalorder %s85, 0
    %s88 = sadd.s32 %s87, 1
    %s89 = scalar_select %p86, %s87, %s88
    %p92 = pneg %p86
    %p93 = scmp.eq.s32.totalorder %s9, 1
    %p94 = por %p92, %p93
    %p95 = scmp.ne.s32.totalorder %s87, %s90
    %p96 = scmp.eq.s32.totalorder %s9, 0
    %p97 = por %p95, %p96
    %p98 = scmp.ne.s32.totalorder %s87, %s90
    %p99 = scmp.eq.s32.totalorder %s14, 1
    %p100 = por %p98, %p99
    %p101 = scmp.ne.s32.totalorder %s90, %s91
    %p102 = scmp.eq.s32.totalorder %s14, 0
    %p103 = por %p101, %p102
    %p104 = scmp.ne.s32.totalorder %s90, %s91
    %p105 = scmp.eq.s32.totalorder %s15, 1
    %p106 = por %p104, %p105
    %p108 = scmp.ne.s32.totalorder %s91, %s107
    %p109 = scmp.eq.s32.totalorder %s15, 0
    %p110 = por %p108, %p109
    %p111 = scmp.le.s32.totalorder 1, %s9
    %p112 = scmp.lt.s32.totalorder %s9, 3
    %p113 = pnand %p111, %p112
    %p114 = pneg %p113
    // Predicated region
    $region9: #{tpu_custom_call.1} parent=5 // pred_check
      _
    $region10: #{tpu_custom_call.1} parent=5 // pred_check_branch
      %116 = sbr.rel (%p113) target = $region12
    $region11: #{tpu_custom_call.1} parent=5 // pred_region
      %s117 = ssub.s32 %s9, 1
      // Predicated region
      $region13: #{tpu_custom_call.1} parent=11 // pred_check
        %p118 = pneg %p56
      $region14: #{tpu_custom_call.1} parent=11 // pred_check_branch
        %120 = sbr.rel (%p118) target = $region16
      $region15: #{tpu_custom_call.1} parent=11 // pred_region
        _
      $region16: #{tpu_custom_call.1} parent=11 // pred_fallthru
        _
      // Predicated region
      $region17: #{tpu_custom_call.1} parent=11 // pred_check
        %p121 = pneg %p77
      $region18: #{tpu_custom_call.1} parent=11 // pred_check_branch
        %123 = sbr.rel (%p121) target = $region20
      $region19: #{tpu_custom_call.1} parent=11 // pred_region
        _
      $region20: #{tpu_custom_call.1} parent=11 // pred_fallthru
        _
    $region12: #{tpu_custom_call.1} parent=5 // pred_fallthru
      _
    %p124 = scmp.lt.s32.totalorder %s9, 2
    // Predicated region
    $region21: #{tpu_custom_call.1} parent=5 // pred_check
      %p125 = pneg %p124
    $region22: #{tpu_custom_call.1} parent=5 // pred_check_branch
      %127 = sbr.rel (%p125) target = $region24
    $region23: #{tpu_custom_call.1} parent=5 // pred_region
      // Predicated region
      $region25: #{tpu_custom_call.1} parent=23 // pred_check
        %p128 = pneg %p29
      $region26: #{tpu_custom_call.1} parent=23 // pred_check_branch
        %130 = sbr.rel (%p128) target = $region28
      $region27: #{tpu_custom_call.1} parent=23 // pred_region
        %p131 = scmp.lt.s32.totalorder %s9, 1
        %s132 = scalar_select %p131, %s9, 1
        %s133 = smul.addr %s132, 2
        %s134 = smul.addr %s133, 4
        %s135 = scalar_lea.vmem %s0, %s134
      $region28: #{tpu_custom_call.1} parent=23 // pred_fallthru
        _
    $region24: #{tpu_custom_call.1} parent=5 // pred_fallthru
      _
    %p136 = scmp.le.s32.totalorder 1, %s9
    %p137 = scmp.lt.s32.totalorder %s9, 3
    %p138 = pnand %p136, %p137
    %p139 = pneg %p138
    // Predicated region
    $region29: #{tpu_custom_call.1} parent=5 // pred_check
      _
    $region30: #{tpu_custom_call.1} parent=5 // pred_check_branch
      %141 = sbr.rel (%p138) target = $region32
    $region31: #{tpu_custom_call.1} parent=5 // pred_region
      %s142 = ssub.s32 %s9, 1
      %p143 = scmp.lt.s32.totalorder %s14, 1
      %s144 = scalar_select %p143, %s14, 1
      %s145 = smul.addr %s144, 2
      %s146 = smul.addr %s145, 4
      %s147 = scalar_lea.vmem %s0, %s146
      %p148 = pneg %p35
      %p149 = pneg %p32
      %p150 = pneg %p56
      %p151 = pneg %p53
      %p152 = pneg %p77
      %p153 = pneg %p74
      %p154 = pneg %p103
      %p155 = pneg %p100
      %p156 = scmp.lt.s32.totalorder %s14, 1
      %s157 = scalar_select %p156, %s14, 1
      %s158 = smul.addr %s157, 2
      %s159 = smul.addr %s158, 4
      %s160 = scalar_lea.vmem %s3, %s159
      %p161 = scmp.lt.s32.totalorder %s14, 1
      %s162 = scalar_select %p161, %s14, 1
      %s163 = smul.addr %s162, 2
      %s164 = smul.addr %s163, 4
      %s165 = scalar_lea.vmem %s0, %s164
      %p166 = scmp.lt.s32.totalorder %s14, 1
      %s167 = scalar_select %p166, %s14, 1
      %s168 = smul.addr %s167, 2
      %s169 = smul.addr %s168, 4
      %s170 = scalar_lea.vmem %s3, %s169
      %v171 = vld [vmem:[%s165] sm:$0x77]
      %173 = vst [vmem:[#allocation1] ss:$2 sm:$0xff] %v171
      %v174 = vld.sshfl [vmem:[#allocation1] sm:$0xff pattern:$0x75316420]
      %v175 = vld.sshfl [vmem:[#allocation1 + $0x8] sm:$0xff pattern:$0x75316420]
      %vm178 = vcmask 1042432
      %v179 = vsel %vm178, %v174, 0.0
      %v180 = vsel %vm178, %v175, 0.0
      %v181 = vadd.f32 %v179, %v180
      %182 = vadd.xlane.f32.xlu0 %v181
      %v183 = vpop.xlane.xlu0 %182
      %v184 = vmul.f32 %v183, 0.00390625
      %v187 = vunpack.c.l.s4 839922192
      %v188 = vunpack.c.0.s8 %v187
      %v189 = vperm.slane %v184, %v188
      %v191 = vsub.f32 %v171, %v189
      %v192 = vmul.f32 %v191, %v191
      %194 = vst [vmem:[#allocation1] ss:$2 sm:$0xff] %v192
      %v195 = vld.sshfl [vmem:[#allocation1] sm:$0xff pattern:$0x75316420]
      %v196 = vld.sshfl [vmem:[#allocation1 + $0x8] sm:$0xff pattern:$0x75316420]
      %v199 = vsel %vm178, %v195, 0.0
      %v200 = vsel %vm178, %v196, 0.0
      %v201 = vadd.f32 %v199, %v200
      %202 = vadd.xlane.f32.xlu0 %v201
      %v203 = vpop.xlane.xlu0 %202
      %v204 = vmul.f32 %v203, 0.00390625
      %v205 = vadd.f32 %v204, 1e-05
      %v206 = vrsqrt.pop %v205
      %v207 = vmul.f32 %v206, %v205
      %v208 = vmul.f32 %v207, %v206
      %v209 = vmul.f32 0.5, %v208
      %v210 = vsub.f32 1.5, %v209
      %v211 = vmul.f32 %v206, %v210
      %vm212 = vweird.f32 %v205
      %vm213 = vweird.f32 %v206
      %vm214 = vmor %vm212, %vm213
      %v215 = vsel %vm214, %v206, %v211
      %v216 = vld [vmem:[%s1] sm:$0x7]
      %v217 = vmul.f32 %v215, %v216
      %219 = vset.pattern.permute.xlu0 0
      %220 = vperm.xlu0 %219, %v217
      %v221 = vpop.permute.xlu0 %220
      %v223 = vunpack.c.l.s4 839922192
      %v224 = vunpack.c.0.s8 %v223
      %v225 = vperm.slane %v221, %v224
      %v227 = vmul.f32 %v191, %v225
      %v228 = vld [vmem:[%s2] sm:$0x7]
      %230 = vset.pattern.permute.xlu0 0
      %231 = vperm.xlu0 %230, %v228
      %v232 = vpop.permute.xlu0 %231
      %v234 = vunpack.c.l.s4 839922192
      %v235 = vunpack.c.0.s8 %v234
      %v236 = vperm.slane %v232, %v235
      %v238 = vadd.f32 %v227, %v236
      %239 = vst [vmem:[%s170] sm:$0x77] %v238
      %p240 = scmp.lt.s32.totalorder %s14, 1
      %s241 = scalar_select %p240, %s14, 1
      %s242 = smul.addr %s241, 2
      %s243 = smul.addr %s242, 4
      %s244 = scalar_lea.vmem %s3, %s243
      // Predicated region
      $region33: #{tpu_custom_call.1} parent=31 // pred_check
        %p245 = pneg %p100
      $region34: #{tpu_custom_call.1} parent=31 // pred_check_branch
        %247 = sbr.rel (%p245) target = $region36
      $region35: #{tpu_custom_call.1} parent=31 // pred_region
        _
      $region36: #{tpu_custom_call.1} parent=31 // pred_fallthru
        _
    $region32: #{tpu_custom_call.1} parent=5 // pred_fallthru
      _
    %p248 = scmp.le.s32.totalorder 2, %s9
    // Predicated region
    $region37: #{tpu_custom_call.1} parent=5 // pred_check
      %p249 = pneg %p248
    $region38: #{tpu_custom_call.1} parent=5 // pred_check_branch
      %251 = sbr.rel (%p249) target = $region40
    $region39: #{tpu_custom_call.1} parent=5 // pred_region
      %s252 = ssub.s32 %s9, 2
      // Predicated region
      $region41: #{tpu_custom_call.1} parent=39 // pred_check
        %p253 = pneg %p106
      $region42: #{tpu_custom_call.1} parent=39 // pred_check_branch
        %255 = sbr.rel (%p253) target = $region44
      $region43: #{tpu_custom_call.1} parent=39 // pred_region
        %p256 = scmp.lt.s32.totalorder %s15, 1
        %s257 = scalar_select %p256, %s15, 1
        %s258 = smul.addr %s257, 2
        %s259 = smul.addr %s258, 4
        %s260 = scalar_lea.vmem %s3, %s259
      $region44: #{tpu_custom_call.1} parent=39 // pred_fallthru
        _
    $region40: #{tpu_custom_call.1} parent=5 // pred_fallthru
      _
  $region6: #{tpu_custom_call.1} parent=0 // loop_footer
    %s13 = sadd.s32 1, %s9
  $region7: #{tpu_custom_call.1} parent=0 // loop_footer_branch
    %8 = sbr.rel target = $region3
  $region8: #{tpu_custom_call.1} parent=0 // loop_exit
    _

</llo_original>
